<compile_context>
chip_gen: v5e
topology: v5e:2x2
jax: 0.10.0
libtpu: 0.0.40
codegen_flags: <defaults>
</compile_context>

<pallas_src>
import functools

import jax
import jax.numpy as jnp
from jax import lax
from jax.experimental import pallas as pl
from jax.experimental.pallas import tpu as pltpu

_LANE_CANDIDATES = (1024, 512, 256, 128)


def _sublane_multiple(dtype):
    # second-to-last block dim must be a multiple of this for packed dtypes
    return {4: 8, 2: 16, 1: 32}.get(jnp.dtype(dtype).itemsize, 8)


def _l1_mean_kernel(a_ref, b_ref, o_ref, acc_ref, *, rows, row_tile, n_elements,
                    ragged):
    """Accumulates |a - b| into an (8, w) VMEM accumulator; mean on last step."""
    i = pl.program_id(0)

    @pl.when(i == 0)
    def _():
        acc_ref[...] = jnp.zeros_like(acc_ref)

    d = jnp.abs(a_ref[...].astype(jnp.float32) - b_ref[...].astype(jnp.float32))

    if ragged:
        # Last block may extend past `rows`; zero the invalid (garbage) rows.
        row_ids = i * row_tile + lax.broadcasted_iota(jnp.int32, d.shape, 0)
        d = jnp.where(row_ids < rows, d, 0.0)

    # Fold the whole block into one (8, w) vreg-row tile: splitting the leading
    # dim into groups of 8 is layout-preserving, and the axis-0 sum is pure VPU
    # adds (no cross-lane work), all hidden under the input DMA.
    acc_ref[...] += d.reshape(row_tile // 8, 8, d.shape[-1]).sum(axis=0)

    @pl.when(i == pl.num_programs(0) - 1)
    def _():
        # single small cross-lane reduce at the very end
        o_ref[0, 0] = jnp.sum(acc_ref[...]) / jnp.float32(n_elements)


def intensity_loss(image_A, image_B, image_fused, *,
                   target_block_bytes=2 * 1024 * 1024,
                   min_pallas_bytes=256 * 1024):
    """Pallas equivalent of Intensity.forward: F.l1_loss(image_fused, image_B)."""
    del image_A  # unused, matching the PyTorch reference
    assert image_B.shape == image_fused.shape

    n = int(image_B.size)
    out_dtype = jnp.result_type(image_B.dtype, image_fused.dtype)
    if not jnp.issubdtype(out_dtype, jnp.floating):
        out_dtype = jnp.float32

    itemsize = max(jnp.dtype(image_B.dtype).itemsize,
                   jnp.dtype(image_fused.dtype).itemsize)
    sub = max(_sublane_multiple(image_B.dtype),
              _sublane_multiple(image_fused.dtype))

    # Lane width: widest candidate that divides n exactly (so the 2-D slab is a
    # free bitcast reshape -- no jnp.pad copy) and leaves >= one sublane group.
    lane_w = None
    for cand in _LANE_CANDIDATES:
        if n % cand == 0 and (n // cand) >= sub:
            lane_w = cand
            break

    total_bytes = n * (jnp.dtype(image_B.dtype).itemsize +
                       jnp.dtype(image_fused.dtype).itemsize)
    if lane_w is None or total_bytes < min_pallas_bytes:
        # Tiny or awkwardly-shaped inputs: a fused XLA elementwise+reduce pass
        # beats the pallas_call fixed cost.
        return jnp.mean(
            jnp.abs(image_fused.astype(jnp.float32) -
                    image_B.astype(jnp.float32))).astype(out_dtype)

    rows = n // lane_w

    # Size the row tile in BYTES (~target_block_bytes per input per grid step)
    # so bf16/int8 inputs still move enough per step to amortize overhead.
    rt = max(sub, (target_block_bytes // (lane_w * itemsize)) // sub * sub)
    rt = min(rt, (rows // sub) * sub)
    grid = (pl.cdiv(rows, rt),)
    ragged = (rows % rt) != 0

    # Free bitcast reshapes; inputs stay in their original dtype in HBM.
    a2d = image_fused.reshape(rows, lane_w)
    b2d = image_B.reshape(rows, lane_w)

    kernel = functools.partial(_l1_mean_kernel, rows=rows, row_tile=rt,
                               n_elements=n, ragged=ragged)

    out = pl.pallas_call(
        kernel,
        out_shape=jax.ShapeDtypeStruct((1, 1), jnp.float32),
        grid_spec=pltpu.PrefetchScalarGridSpec(
            num_scalar_prefetch=0,
            grid=grid,
            in_specs=[
                pl.BlockSpec((rt, lane_w), lambda i: (i, 0)),
                pl.BlockSpec((rt, lane_w), lambda i: (i, 0)),
            ],
            out_specs=pl.BlockSpec(
                (1, 1), lambda i: (0, 0),
                memory_space=pltpu.MemorySpace.SMEM),
            scratch_shapes=[pltpu.VMEM((8, lane_w), jnp.float32)],
        ),
        compiler_params=pltpu.CompilerParams(
            dimension_semantics=("arbitrary",),
        ),
    )(a2d, b2d)

    return out[0, 0].astype(out_dtype)


if __name__ == "__main__":
    key = jax.random.PRNGKey(0)
    k_a, k_b, k_f = jax.random.split(key, 3)

    # Small NCHW shapes, matching the PyTorch conv convention.
    B, C, H, W = 2, 4, 16, 16
    image_A = jax.random.normal(k_a, (B, C, H, W), dtype=jnp.float32)
    image_B = jax.random.normal(k_b, (B, C, H, W), dtype=jnp.float32)
    image_F = jax.random.normal(k_f, (B, C, H, W), dtype=jnp.float32)

    ref = jnp.mean(jnp.abs(image_F - image_B))

    # Force the Pallas path on the small example (default would take the
    # small-input XLA fallback).
    loss = jax.block_until_ready(
        intensity_loss(image_A, image_B, image_F, min_pallas_bytes=0))
    assert jnp.allclose(loss, ref, rtol=1e-5, atol=1e-6), (loss, ref)

    # Default path (small-input fallback) must agree too.
    loss_fb = jax.block_until_ready(intensity_loss(image_A, image_B, image_F))
    assert jnp.allclose(loss_fb, ref, rtol=1e-5, atol=1e-6), (loss_fb, ref)

    # Larger case: multi-block accumulation, no ragged tail.
    k_b2, k_f2 = jax.random.split(k_b)
    big_B = jax.random.normal(k_b2, (1, 4, 512, 512), dtype=jnp.float32)
    big_F = jax.random.normal(k_f2, (1, 4, 512, 512), dtype=jnp.float32)
    loss2 = jax.block_until_ready(intensity_loss(big_B, big_B, big_F))
    ref2 = jnp.mean(jnp.abs(big_F - big_B))
    assert jnp.allclose(loss2, ref2, rtol=1e-4, atol=1e-6), (loss2, ref2)

    # Ragged case: 75 rows with a 72-row tile -> exercises the in-kernel mask.
    k_b3, k_f3 = jax.random.split(k_f)
    rag_B = jax.random.normal(k_b3, (1, 3, 200, 128), dtype=jnp.float32)
    rag_F = jax.random.normal(k_f3, (1, 3, 200, 128), dtype=jnp.float32)
    loss3 = jax.block_until_ready(intensity_loss(rag_B, rag_B, rag_F))
    ref3 = jnp.mean(jnp.abs(rag_F - rag_B))
    assert jnp.allclose(loss3, ref3, rtol=1e-4, atol=1e-6), (loss3, ref3)

    print("KERNEL_OK")
</pallas_src>

<mosaic_0001>
module attributes {stable_mosaic.version = 11 : i64} {
  func.func @_l1_mean_kernel(%arg0: i32, %arg1: memref<8x256xf32, #tpu.memory_space<vmem>>, %arg2: memref<8x256xf32, #tpu.memory_space<vmem>>, %arg3: memref<1x1xf32, #tpu.memory_space<smem>>, %arg4: memref<8x256xf32, #tpu.memory_space<vmem>>) attributes {dimension_semantics = [#tpu.dimension_semantics<arbitrary>], iteration_bounds = array<i64: 1>, scalar_prefetch = 0 : i64, scratch_operands = 1 : i64, tpu.core_type = #tpu.core_type<tc>, window_params = [{transform_indices = @transform_0, window_bounds = array<i64: 8, 256>}, {transform_indices = @transform_1, window_bounds = array<i64: 8, 256>}, {transform_indices = @transform_2, window_bounds = array<i64: 1, 1>}]} {
    %c0_i32 = arith.constant 0 : i32
    %0 = arith.cmpi eq, %arg0, %c0_i32 : i32
    %1 = arith.extui %0 : i1 to i32
    %c0_i32_0 = arith.constant 0 : i32
    %2 = arith.cmpi ne, %1, %c0_i32_0 : i32
    scf.if %2 {
      %cst_10 = arith.constant 0.000000e+00 : f32
      %15 = vector.broadcast %cst_10 : f32 to vector<8x256xf32>
      %c0_11 = arith.constant 0 : index
      %c0_12 = arith.constant 0 : index
      %16 = vector.load %arg4[%c0_11, %c0_12] : memref<8x256xf32, #tpu.memory_space<vmem>>, vector<8x256xf32>
      tpu.vector_store %arg4[%c0_11, %c0_12], %15 {strides = array<i32>} : memref<8x256xf32, #tpu.memory_space<vmem>>, vector<8x256xf32>,
    } else {
    }
    %c0 = arith.constant 0 : index
    %c0_1 = arith.constant 0 : index
    %3 = vector.load %arg1[%c0, %c0_1] : memref<8x256xf32, #tpu.memory_space<vmem>>, vector<8x256xf32>
    %c0_2 = arith.constant 0 : index
    %c0_3 = arith.constant 0 : index
    %4 = vector.load %arg2[%c0_2, %c0_3] : memref<8x256xf32, #tpu.memory_space<vmem>>, vector<8x256xf32>
    %5 = arith.subf %3, %4 : vector<8x256xf32>
    %6 = math.absf %5 : vector<8x256xf32>
    %c0_4 = arith.constant 0 : index
    %c0_5 = arith.constant 0 : index
    %7 = vector.load %arg4[%c0_4, %c0_5] : memref<8x256xf32, #tpu.memory_space<vmem>>, vector<8x256xf32>
    %8 = vector.shape_cast %6 : vector<8x256xf32> to vector<1x8x256xf32>
    %cst = arith.constant dense<0.000000e+00> : vector<8x256xf32>
    %9 = vector.multi_reduction <add>, %8, %cst [0] : vector<1x8x256xf32> to vector<8x256xf32>
    %10 = arith.addf %7, %9 : vector<8x256xf32>
    %c0_6 = arith.constant 0 : index
    %c0_7 = arith.constant 0 : index
    %11 = vector.load %arg4[%c0_6, %c0_7] : memref<8x256xf32, #tpu.memory_space<vmem>>, vector<8x256xf32>
    tpu.vector_store %arg4[%c0_6, %c0_7], %10 {strides = array<i32>} : memref<8x256xf32, #tpu.memory_space<vmem>>, vector<8x256xf32>,
    %c0_i32_8 = arith.constant 0 : i32
    %12 = arith.cmpi eq, %arg0, %c0_i32_8 : i32
    %13 = arith.extui %12 : i1 to i32
    %c0_i32_9 = arith.constant 0 : i32
    %14 = arith.cmpi ne, %13, %c0_i32_9 : i32
    scf.if %14 {
      %c0_10 = arith.constant 0 : index
      %c0_11 = arith.constant 0 : index
      %15 = vector.load %arg4[%c0_10, %c0_11] : memref<8x256xf32, #tpu.memory_space<vmem>>, vector<8x256xf32>
      %16 = vector.shape_cast %15 : vector<8x256xf32> to vector<1x8x256xf32>
      %cst_12 = arith.constant dense<0.000000e+00> : vector<1xf32>
      %17 = vector.multi_reduction <add>, %16, %cst_12 [1, 2] : vector<1x8x256xf32> to vector<1xf32>
      %18 = vector.shape_cast %17 : vector<1xf32> to vector<1x1x1xf32>
      %19 = vector.extract %18[0, 0, 0] : f32 from vector<1x1x1xf32>
      %cst_13 = arith.constant 2.048000e+03 : f32
      %20 = arith.divf %19, %cst_13 : f32
      %c0_14 = arith.constant 0 : index
      %c0_15 = arith.constant 0 : index
      %21 = memref.load %arg3[%c0_14, %c0_15] : memref<1x1xf32, #tpu.memory_space<smem>>
      memref.store %20, %arg3[%c0_14, %c0_15] : memref<1x1xf32, #tpu.memory_space<smem>>
    } else {
    }
    return
  }
  func.func @transform_0(%arg0: i32) -> (i32, i32) {
    %c0_i32 = arith.constant 0 : i32
    %c0_i32_0 = arith.constant 0 : i32
    return %arg0, %c0_i32 : i32, i32
  }
  func.func @transform_1(%arg0: i32) -> (i32, i32) {
    %c0_i32 = arith.constant 0 : i32
    %c0_i32_0 = arith.constant 0 : i32
    return %arg0, %c0_i32 : i32, i32
  }
  func.func @transform_2(%arg0: i32) -> (i32, i32) {
    %c0_i32 = arith.constant 0 : i32
    %c0_i32_0 = arith.constant 0 : i32
    %c0_i32_1 = arith.constant 0 : i32
    return %c0_i32, %c0_i32_0 : i32, i32
  }
}

</mosaic_0001>

<llo_original>
// kernel: tpu_custom_call.1
$region0: #{tpu_custom_call.1}
  #allocation0 [shape = 'u32[]', space=smem, size = 0x4, offset = 0x4, fixed_abs, tag = 'smem constant byte address 0x4 - core index']
  #allocation1 [shape = 'u32[72,128]{1,0:T(1,128)}', space=vmem, size = 0x9000, scoped, tag = 'internal scratch']
  #allocation2 [shape = 'f32[8,256]{1,0:T(8,128)}', space=vmem, size = 0x2000, scoped, tag = 'scratch operand']
  %s0 = inlined_call_operand.hbm [shape: f32[8,256], index: 0, kind: input, shape index: {}]
  %s1 = inlined_call_operand.hbm [shape: f32[8,256], index: 1, kind: input, shape index: {}]
  %s2 = inlined_call_operand.hbm [shape: f32[1,1], index: 2, kind: output, shape index: {}]
  %s3 = sld [smem:[#allocation0]]
  $region34: #{tpu_custom_call.1} parent=0
    _
  %s5 = ssub.s32 1, %s3
  %s6 = scalar_select 0, %s5, %s3
  $region1: #{tpu_custom_call.1} parent=0
    #allocation3 [shape = 'u8[8192]{0}', space=vmem, size = 0x2000, scoped, tag = 'input window, operand 0, single buffered']
    #allocation4 [shape = 's32[1]{0}', space=sflag, size = 0x4, scoped, tag = 'scoped memory for tpu_custom_call.1']
    #allocation5 [shape = 's32[1]{0}', space=sflag, size = 0x4, scoped, tag = 'scoped memory for tpu_custom_call.1']
    #allocation6 [shape = 'u8[8192]{0}', space=vmem, size = 0x2000, scoped, tag = 'input window, operand 1, single buffered']
    #allocation7 [shape = 's32[1]{0}', space=sflag, size = 0x4, scoped, tag = 'scoped memory for tpu_custom_call.1']
    #allocation8 [shape = 'u8[512]{0}', space=smem, size = 0x200, scoped, tag = 'output window, operand 0, single buffered']
    %7 = vsyncpa [#allocation4], 0
    %8 = vsyncpa [#allocation7], 0
    %9 = vsyncpa [#allocation5], 0
    // Predicated region
    $region2: #{tpu_custom_call.1} parent=1 // pred_check
      _
    $region3: #{tpu_custom_call.1} parent=1 // pred_check_branch
      %11 = sbr.rel (0) target = $region5
    $region4: #{tpu_custom_call.1} parent=1 // pred_region
      %13 = vsyncadd [#allocation4], 0
      %s15 = sshll.u32 %s0, 4
      %s16 = int_to_ptr.hbm [resolvable:$true] %s15
      %s17 = sshll.u32 [#allocation3], 4
      %s18 = int_to_ptr.vmem [resolvable:$true] %s17
      %20 = dma.hbm_to_vmem [thread:$0]  %s16, 256, %s18, [#allocation4]
    $region5: #{tpu_custom_call.1} parent=1 // pred_fallthru
      _
    // Predicated region
    $region6: #{tpu_custom_call.1} parent=1 // pred_check
      _
    $region7: #{tpu_custom_call.1} parent=1 // pred_check_branch
      %22 = sbr.rel (0) target = $region9
    $region8: #{tpu_custom_call.1} parent=1 // pred_region
      %24 = vsyncadd [#allocation7], 0
      %s26 = sshll.u32 %s1, 4
      %s27 = int_to_ptr.hbm [resolvable:$true] %s26
      %s28 = sshll.u32 [#allocation6], 4
      %s29 = int_to_ptr.vmem [resolvable:$true] %s28
      %31 = dma.hbm_to_vmem [thread:$0]  %s27, 256, %s29, [#allocation7]
    $region9: #{tpu_custom_call.1} parent=1 // pred_fallthru
      _
    // Predicated region
    $region10: #{tpu_custom_call.1} parent=1 // pred_check
      _
    $region11: #{tpu_custom_call.1} parent=1 // pred_check_branch
      %33 = sbr.rel (0) target = $region13
    $region12: #{tpu_custom_call.1} parent=1 // pred_region
      %35 = dma.done [#allocation4], 256
    $region13: #{tpu_custom_call.1} parent=1 // pred_fallthru
      _
    // Predicated region
    $region14: #{tpu_custom_call.1} parent=1 // pred_check
      _
    $region15: #{tpu_custom_call.1} parent=1 // pred_check_branch
      %37 = sbr.rel (0) target = $region17
    $region16: #{tpu_custom_call.1} parent=1 // pred_region
      %39 = dma.done [#allocation7], 256
    $region17: #{tpu_custom_call.1} parent=1 // pred_fallthru
      _
    %p40 = scmp.eq.s32.totalorder 0, 0
    // Predicated region
    $region18: #{tpu_custom_call.1} parent=1 // pred_check
      %p41 = pneg %p40
    $region19: #{tpu_custom_call.1} parent=1 // pred_check_branch
      %43 = sbr.rel (%p41) target = $region21
    $region20: #{tpu_custom_call.1} parent=1 // pred_region
      %44 = vst [vmem:[#allocation2] sm:$0xff] 0.0
      %45 = vst [vmem:[#allocation2 + $0x8] sm:$0xff] 0.0
    $region21: #{tpu_custom_call.1} parent=1 // pred_fallthru
      _
    %v46 = vld [vmem:[#allocation3] sm:$0xff]
    %v47 = vld [vmem:[#allocation3 + $0x8] sm:$0xff]
    %v48 = vld [vmem:[#allocation6] sm:$0xff]
    %v49 = vld [vmem:[#allocation6 + $0x8] sm:$0xff]
    %v50 = vsub.f32 %v46, %v48
    %v51 = vsub.f32 %v47, %v49
    %v52 = vand.u32 2147483647, %v50
    %v53 = vand.u32 2147483647, %v51
    %v54 = vld [vmem:[#allocation2] sm:$0xff]
    %v55 = vld [vmem:[#allocation2 + $0x8] sm:$0xff]
    %v56 = vadd.f32 %v52, 0.0
    %v57 = vadd.f32 %v53, 0.0
    %v58 = vadd.f32 %v54, %v56
    %v59 = vadd.f32 %v55, %v57
    %60 = vst [vmem:[#allocation2] sm:$0xff] %v58
    %61 = vst [vmem:[#allocation2 + $0x8] sm:$0xff] %v59
    // Predicated region
    $region22: #{tpu_custom_call.1} parent=1 // pred_check
      %p62 = pneg %p40
    $region23: #{tpu_custom_call.1} parent=1 // pred_check_branch
      %64 = sbr.rel (%p62) target = $region25
    $region24: #{tpu_custom_call.1} parent=1 // pred_region
      %v65 = vld [vmem:[#allocation2] sm:$0xff]
      %v66 = vld [vmem:[#allocation2 + $0x8] sm:$0xff]
      %v67 = vadd.f32 %v65, %v66
      %68 = vadd.xlane.f32.xlu0 %v67
      %v69 = vpop.xlane.xlu0 %68
      %v70 = vrot.slane %v69, 4
      %v71 = vadd.f32 %v69, %v70
      %v72 = vrot.slane %v71, 2
      %v73 = vadd.f32 %v71, %v72
      %v74 = vrot.slane %v73, 1
      %v75 = vadd.f32 %v73, %v74
      %s76 = vtos %v75
      %v77 = vrcp.pop 2048.0
      %v78 = vmul.f32 2048.0, %v77
      %v79 = vsub.f32 1.0, %v78
      %v80 = vmul.f32 %v77, %v79
      %v81 = vadd.f32 %v77, %v80
      %vm82 = vweird.f32 %v77
      %v83 = vsel %vm82, %v77, %v81
      %s84 = vtos %v83
      %s85 = smul.f32 %s76, %s84
      %s86 = scalar_lea.smem [#allocation8], 0
      %87 = sst [smem:[%s86]] %s85
    $region25: #{tpu_custom_call.1} parent=1 // pred_fallthru
      _
    // Predicated region
    $region26: #{tpu_custom_call.1} parent=1 // pred_check
      _
    $region27: #{tpu_custom_call.1} parent=1 // pred_check_branch
      %89 = sbr.rel (0) target = $region29
    $region28: #{tpu_custom_call.1} parent=1 // pred_region
      %91 = vsyncadd [#allocation5], 0
      %s93 = sshll.u32 %s2, 4
      %s94 = int_to_ptr.hbm [resolvable:$true] %s93
      %96 = dma.smem_to_hbm [#allocation8], 16, %s94, [#allocation5]
    $region29: #{tpu_custom_call.1} parent=1 // pred_fallthru
      _
    // Predicated region
    $region30: #{tpu_custom_call.1} parent=1 // pred_check
      _
    $region31: #{tpu_custom_call.1} parent=1 // pred_check_branch
      %98 = sbr.rel (0) target = $region33
    $region32: #{tpu_custom_call.1} parent=1 // pred_region
      %100 = dma.done [#allocation5], 16
    $region33: #{tpu_custom_call.1} parent=1 // pred_fallthru
      _
    %101 = sfence
    %102 = vsyncpa [#allocation4], 1
    %103 = vsyncpa [#allocation7], 1
    %104 = vsyncpa [#allocation5], 1

</llo_original>
